<compile_context>
chip_gen: v5e
topology: v5e:2x2
jax: 0.10.0
libtpu: 0.0.40
codegen_flags: <defaults>
</compile_context>

<pallas_src>
import functools

import jax
import jax.numpy as jnp
from jax.experimental import pallas as pl
from jax.experimental.pallas import tpu as pltpu


N_OUT = 2  # FNet NSP head: nn.Linear(hidden_size, 2)


def _nsp_head_kernel(x_ref, w_ref, b_ref, o_ref):
    # x_ref: [TB, H]  activation batch tile (streamed over the grid)
    # w_ref: [H, 2]   pre-transposed Linear weight (resident, constant index_map)
    # b_ref: [1, 2]   bias (resident)
    # o_ref: [TB, 2]
    y = jnp.dot(x_ref[...], w_ref[...], preferred_element_type=jnp.float32)
    y = y + b_ref[...].astype(jnp.float32)
    o_ref[...] = y.astype(o_ref.dtype)


def _vmem_capacity_bytes() -> int:
    try:
        return int(pltpu.get_tpu_info().vmem_capacity_bytes)
    except Exception:
        return 64 << 20  # conservative: v7x per-TensorCore physical VMEM


def _pick_batch_tile(B: int, H: int, itemsize: int) -> int:
    """VMEM-budgeted, 8-aligned batch tile for a cdiv grid (ragged last tile OK)."""
    # Budget the double-buffered activation stream (the only big operand).
    budget = min(_vmem_capacity_bytes() // 8, 8 << 20)
    tb = budget // (2 * H * itemsize)
    tb = max(8, min(1024, (tb // 8) * 8))
    if B >= 16:
        # Keep >= 2 grid steps so the "parallel" batch axis can shard across
        # v7x's two TensorCores.
        half = (((B + 1) // 2) + 7) // 8 * 8
        tb = min(tb, half)
    if tb >= B:
        return B  # single full-extent block: always legal, zero grid overhead
    return tb


def prepare_nsp_head_params(weight: jax.Array, bias: jax.Array, compute_dtype=None):
    """One-time parameter prep outside the hot path.

    weight: [2, H] (torch nn.Linear [out, in] layout), bias: [2].
    Returns (w_t [H, 2], b2d [1, 2]); optionally cast to a compute dtype (bf16).
    """
    w_t = weight.T
    b2d = bias.reshape(1, -1)
    if compute_dtype is not None:
        w_t = w_t.astype(compute_dtype)
        b2d = b2d.astype(compute_dtype)
    return w_t, b2d


_SINGLE_BUFFER_PARAMS_OK = True  # flipped off if pl.Buffered(1) fails to lower


@functools.lru_cache(maxsize=None)
def _build_call(B, H, n_out, dtype, TB, single_buffer_params):
    grid = (pl.cdiv(B, TB),)
    itemsize = jnp.dtype(dtype).itemsize

    param_kwargs = {}
    if single_buffer_params and hasattr(pl, "Buffered"):
        # Resident operands (constant index_map) do not need a second buffer.
        param_kwargs = dict(pipeline_mode=pl.Buffered(1))

    in_specs = [
        pl.BlockSpec((TB, H), lambda i: (i, 0)),                      # streamed
        pl.BlockSpec((H, n_out), lambda i: (0, 0), **param_kwargs),   # resident
        pl.BlockSpec((1, n_out), lambda i: (0, 0), **param_kwargs),   # resident
    ]
    out_specs = pl.BlockSpec((TB, n_out), lambda i: (i, 0))

    cost = pl.CostEstimate(
        flops=2 * B * H * n_out,
        transcendentals=0,
        bytes_accessed=(B * H + H * n_out + n_out + B * n_out) * itemsize,
    )

    # Only set an explicit VMEM limit if the footprint approaches v5e's 16 MiB
    # scoped default (never triggers with the 8 MiB activation budget above).
    footprint = (2 * TB * H * itemsize            # double-buffered activations
                 + 2 * (H + 1) * n_out * itemsize  # weight + bias
                 + 2 * TB * n_out * itemsize)      # output tiles
    compiler_kwargs = {}
    if footprint > (12 << 20):
        compiler_kwargs["vmem_limit_bytes"] = min(2 * footprint, 48 << 20)

    return pl.pallas_call(
        _nsp_head_kernel,
        out_shape=jax.ShapeDtypeStruct((B, n_out), dtype),
        grid=grid,
        in_specs=in_specs,
        out_specs=out_specs,
        compiler_params=pltpu.CompilerParams(
            dimension_semantics=("parallel",),
            **compiler_kwargs,
        ),
        cost_estimate=cost,
    )


def fnet_only_nsp_head(pooled_output: jax.Array, w_t: jax.Array, b2d: jax.Array) -> jax.Array:
    """pooled_output: [B, H]; w_t: [H, 2] (pre-transposed); b2d: [1, 2] -> [B, 2]."""
    global _SINGLE_BUFFER_PARAMS_OK
    B, H = pooled_output.shape
    n_out = w_t.shape[1]
    dtype = jnp.dtype(pooled_output.dtype)
    TB = _pick_batch_tile(B, H, dtype.itemsize)

    if _SINGLE_BUFFER_PARAMS_OK:
        try:
            call = _build_call(B, H, n_out, dtype, TB, True)
            return call(pooled_output, w_t, b2d)
        except Exception:
            # pl.Buffered(1) unsupported on this jax version: use default buffering.
            _SINGLE_BUFFER_PARAMS_OK = False
    call = _build_call(B, H, n_out, dtype, TB, False)
    return call(pooled_output, w_t, b2d)


def _reference(pooled_output, weight, bias):
    return pooled_output @ weight.T + bias


if __name__ == "__main__":
    # --- Test 1: module-scale shapes (batch=2, hidden=32), f32, single block. ---
    B, H = 2, 32
    k_x, k_w, k_b = jax.random.split(jax.random.PRNGKey(0), 3)
    x = jax.random.normal(k_x, (B, H), dtype=jnp.float32)
    w = jax.random.normal(k_w, (N_OUT, H), dtype=jnp.float32) * 0.02
    b = jax.random.normal(k_b, (N_OUT,), dtype=jnp.float32) * 0.02
    w_t, b2d = prepare_nsp_head_params(w, b)
    out = jax.block_until_ready(fnet_only_nsp_head(x, w_t, b2d))
    ref = _reference(x, w, b)
    assert out.shape == (B, N_OUT)
    assert jnp.allclose(out, ref, atol=1e-5, rtol=1e-5)

    # --- Test 2: cdiv grid with a ragged last tile (B=24 -> TB=16, tiles 16+8). ---
    B2, H2 = 24, 128
    k_x2, k_w2, k_b2 = jax.random.split(jax.random.PRNGKey(1), 3)
    x2 = jax.random.normal(k_x2, (B2, H2), dtype=jnp.float32)
    w2 = jax.random.normal(k_w2, (N_OUT, H2), dtype=jnp.float32) * 0.02
    b2 = jax.random.normal(k_b2, (N_OUT,), dtype=jnp.float32) * 0.02
    w_t2, b2d2 = prepare_nsp_head_params(w2, b2)
    out2 = jax.block_until_ready(fnet_only_nsp_head(x2, w_t2, b2d2))
    ref2 = _reference(x2, w2, b2)
    assert out2.shape == (B2, N_OUT)
    assert jnp.allclose(out2, ref2, atol=1e-5, rtol=1e-5)

    # --- Test 3: bf16 activations/params (halved HBM stream), ragged 2-step grid. ---
    B3, H3 = 100, 256
    k_x3, k_w3, k_b3 = jax.random.split(jax.random.PRNGKey(2), 3)
    x3 = jax.random.normal(k_x3, (B3, H3), dtype=jnp.float32).astype(jnp.bfloat16)
    w3 = (jax.random.normal(k_w3, (N_OUT, H3), dtype=jnp.float32) * 0.02).astype(jnp.bfloat16)
    b3 = (jax.random.normal(k_b3, (N_OUT,), dtype=jnp.float32) * 0.02).astype(jnp.bfloat16)
    w_t3, b2d3 = prepare_nsp_head_params(w3, b3)
    out3 = jax.block_until_ready(fnet_only_nsp_head(x3, w_t3, b2d3))
    ref3 = _reference(x3.astype(jnp.float32), w3.astype(jnp.float32), b3.astype(jnp.float32))
    assert out3.shape == (B3, N_OUT)
    assert jnp.allclose(out3.astype(jnp.float32), ref3, atol=2e-2, rtol=2e-2)

    print("KERNEL_OK")
</pallas_src>

<mosaic_0001>
module attributes {stable_mosaic.version = 11 : i64} {
  func.func @_nsp_head_kernel(%arg0: i32, %arg1: memref<2x32xf32, #tpu.memory_space<vmem>>, %arg2: memref<32x2xf32, #tpu.memory_space<vmem>>, %arg3: memref<1x2xf32, #tpu.memory_space<vmem>>, %arg4: memref<2x2xf32, #tpu.memory_space<vmem>>) attributes {dimension_semantics = [#tpu.dimension_semantics<parallel>], iteration_bounds = array<i64: 1>, scalar_prefetch = 0 : i64, scratch_operands = 0 : i64, tpu.core_type = #tpu.core_type<tc>, window_params = [{transform_indices = @transform_0, window_bounds = array<i64: 2, 32>}, {pipeline_mode = #tpu.pipeline_mode<synchronous>, transform_indices = @transform_1, window_bounds = array<i64: 32, 2>}, {pipeline_mode = #tpu.pipeline_mode<synchronous>, transform_indices = @transform_2, window_bounds = array<i64: 1, 2>}, {transform_indices = @transform_3, window_bounds = array<i64: 2, 2>}]} {
    %c0 = arith.constant 0 : index
    %c0_0 = arith.constant 0 : index
    %0 = vector.load %arg1[%c0, %c0_0] : memref<2x32xf32, #tpu.memory_space<vmem>>, vector<2x32xf32>
    %c0_1 = arith.constant 0 : index
    %c0_2 = arith.constant 0 : index
    %1 = vector.load %arg2[%c0_1, %c0_2] : memref<32x2xf32, #tpu.memory_space<vmem>>, vector<32x2xf32>
    %cst = arith.constant dense<0.000000e+00> : vector<2x2xf32>
    %2 = tpu.matmul %0, %1, %cst {dimension_numbers = #tpu.dot_dimension_numbers<[1], [0], [0], [1], [0, 0, 1, 1], [], []>} : vector<2x32xf32>, vector<32x2xf32>, vector<2x2xf32> -> vector<2x2xf32>
    %c0_3 = arith.constant 0 : index
    %c0_4 = arith.constant 0 : index
    %3 = vector.load %arg3[%c0_3, %c0_4] : memref<1x2xf32, #tpu.memory_space<vmem>>, vector<1x2xf32>
    %4 = vector.broadcast %3 : vector<1x2xf32> to vector<2x2xf32>
    %5 = arith.addf %2, %4 : vector<2x2xf32>
    %c0_5 = arith.constant 0 : index
    %c0_6 = arith.constant 0 : index
    %6 = vector.load %arg4[%c0_5, %c0_6] : memref<2x2xf32, #tpu.memory_space<vmem>>, vector<2x2xf32>
    tpu.vector_store %arg4[%c0_5, %c0_6], %5 {strides = array<i32>} : memref<2x2xf32, #tpu.memory_space<vmem>>, vector<2x2xf32>,
    return
  }
  func.func @transform_0(%arg0: i32) -> (i32, i32) {
    %c0_i32 = arith.constant 0 : i32
    %c0_i32_0 = arith.constant 0 : i32
    return %arg0, %c0_i32 : i32, i32
  }
  func.func @transform_1(%arg0: i32) -> (i32, i32) {
    %c0_i32 = arith.constant 0 : i32
    %c0_i32_0 = arith.constant 0 : i32
    %c0_i32_1 = arith.constant 0 : i32
    return %c0_i32, %c0_i32_0 : i32, i32
  }
  func.func @transform_2(%arg0: i32) -> (i32, i32) {
    %c0_i32 = arith.constant 0 : i32
    %c0_i32_0 = arith.constant 0 : i32
    %c0_i32_1 = arith.constant 0 : i32
    return %c0_i32, %c0_i32_0 : i32, i32
  }
  func.func @transform_3(%arg0: i32) -> (i32, i32) {
    %c0_i32 = arith.constant 0 : i32
    %c0_i32_0 = arith.constant 0 : i32
    return %arg0, %c0_i32 : i32, i32
  }
}

module attributes {stable_mosaic.version = 11 : i64} {
  func.func @_nsp_head_kernel(%arg0: i32, %arg1: memref<2x32xf32, #tpu.memory_space<vmem>>, %arg2: memref<32x2xf32, #tpu.memory_space<vmem>>, %arg3: memref<1x2xf32, #tpu.memory_space<vmem>>, %arg4: memref<2x2xf32, #tpu.memory_space<vmem>>) attributes {dimension_semantics = [#tpu.dimension_semantics<parallel>], iteration_bounds = array<i64: 1>, scalar_prefetch = 0 : i64, scratch_operands = 0 : i64, tpu.core_type = #tpu.core_type<tc>, window_params = [{transform_indices = @transform_0, window_bounds = array<i64: 2, 32>}, {pipeline_mode = #tpu.pipeline_mode<synchronous>, transform_indices = @transform_1, window_bounds = array<i64: 32, 2>}, {pipeline_mode = #tpu.pipeline_mode<synchronous>, transform_indices = @transform_2, window_bounds = array<i64: 1, 2>}, {transform_indices = @transform_3, window_bounds = array<i64: 2, 2>}]} {
    %c0 = arith.constant 0 : index
    %c0_0 = arith.constant 0 : index
    %0 = vector.load %arg1[%c0, %c0_0] : memref<2x32xf32, #tpu.memory_space<vmem>>, vector<2x32xf32>
    %c0_1 = arith.constant 0 : index
    %c0_2 = arith.constant 0 : index
    %1 = vector.load %arg2[%c0_1, %c0_2] : memref<32x2xf32, #tpu.memory_space<vmem>>, vector<32x2xf32>
    %cst = arith.constant dense<0.000000e+00> : vector<2x2xf32>
    %2 = tpu.matmul %0, %1, %cst {dimension_numbers = #tpu.dot_dimension_numbers<[1], [0], [0], [1], [0, 0, 1, 1], [], []>} : vector<2x32xf32>, vector<32x2xf32>, vector<2x2xf32> -> vector<2x2xf32>
    %c0_3 = arith.constant 0 : index
    %c0_4 = arith.constant 0 : index
    %3 = vector.load %arg3[%c0_3, %c0_4] : memref<1x2xf32, #tpu.memory_space<vmem>>, vector<1x2xf32>
    %4 = vector.broadcast %3 : vector<1x2xf32> to vector<2x2xf32>
    %5 = arith.addf %2, %4 : vector<2x2xf32>
    %c0_5 = arith.constant 0 : index
    %c0_6 = arith.constant 0 : index
    %6 = vector.load %arg4[%c0_5, %c0_6] : memref<2x2xf32, #tpu.memory_space<vmem>>, vector<2x2xf32>
    tpu.vector_store %arg4[%c0_5, %c0_6], %5 {strides = array<i32>} : memref<2x2xf32, #tpu.memory_space<vmem>>, vector<2x2xf32>,
    return
  }
  func.func @transform_0(%arg0: i32) -> (i32, i32) {
    %c0_i32 = arith.constant 0 : i32
    %c0_i32_0 = arith.constant 0 : i32
    return %arg0, %c0_i32 : i32, i32
  }
  func.func @transform_1(%arg0: i32) -> (i32, i32) {
    %c0_i32 = arith.constant 0 : i32
    %c0_i32_0 = arith.constant 0 : i32
    %c0_i32_1 = arith.constant 0 : i32
    return %c0_i32, %c0_i32_0 : i32, i32
  }
  func.func @transform_2(%arg0: i32) -> (i32, i32) {
    %c0_i32 = arith.constant 0 : i32
    %c0_i32_0 = arith.constant 0 : i32
    %c0_i32_1 = arith.constant 0 : i32
    return %c0_i32, %c0_i32_0 : i32, i32
  }
  func.func @transform_3(%arg0: i32) -> (i32, i32) {
    %c0_i32 = arith.constant 0 : i32
    %c0_i32_0 = arith.constant 0 : i32
    return %arg0, %c0_i32 : i32, i32
  }
}

</mosaic_0001>

<llo_original>
// kernel: tpu_custom_call.1
$region0: #{tpu_custom_call.1}
  #allocation0 [shape = 'u32[]', space=smem, size = 0x4, offset = 0x4, fixed_abs, tag = 'smem constant byte address 0x4 - core index']
  #allocation1 [shape = 'u32[72,128]{1,0:T(1,128)}', space=vmem, size = 0x9000, scoped, tag = 'internal scratch']
  %s0 = inlined_call_operand.vmem [shape: f32[2,32], index: 0, kind: input, shape index: {}]
  %s1 = inlined_call_operand.vmem [shape: f32[32,2], index: 1, kind: input, shape index: {}]
  %s2 = inlined_call_operand.vmem [shape: f32[1,2], index: 2, kind: input, shape index: {}]
  %s3 = inlined_call_operand.hbm [shape: f32[2,2], index: 3, kind: output, shape index: {}]
  %s4 = sld [smem:[#allocation0]]
  $region22: #{tpu_custom_call.1} parent=0
    _
  %s6 = ssub.s32 1, %s4
  %s7 = scalar_select 0, %s6, %s4
  $region1: #{tpu_custom_call.1} parent=0
    #allocation2 [shape = 'u8[1024]{0}', space=vmem, size = 0x400, scoped, tag = 'output window, operand 0, single buffered']
    #allocation3 [shape = 's32[1]{0}', space=sflag, size = 0x4, scoped, tag = 'scoped memory for tpu_custom_call.1']
    %8 = vsyncpa [#allocation3], 0
    // Predicated region
    $region2: #{tpu_custom_call.1} parent=1 // pred_check
      _
    $region3: #{tpu_custom_call.1} parent=1 // pred_check_branch
      %10 = sbr.rel (0) target = $region5
    $region4: #{tpu_custom_call.1} parent=1 // pred_region
      _
    $region5: #{tpu_custom_call.1} parent=1 // pred_fallthru
      _
    // Predicated region
    $region6: #{tpu_custom_call.1} parent=1 // pred_check
      _
    $region7: #{tpu_custom_call.1} parent=1 // pred_check_branch
      %12 = sbr.rel (0) target = $region9
    $region8: #{tpu_custom_call.1} parent=1 // pred_region
      _
    $region9: #{tpu_custom_call.1} parent=1 // pred_fallthru
      _
    // Predicated region
    $region10: #{tpu_custom_call.1} parent=1 // pred_check
      _
    $region11: #{tpu_custom_call.1} parent=1 // pred_check_branch
      %14 = sbr.rel (0) target = $region13
    $region12: #{tpu_custom_call.1} parent=1 // pred_region
      _
    $region13: #{tpu_custom_call.1} parent=1 // pred_fallthru
      _
    %v15 = vld [vmem:[%s0] sm:$0x3]
    %v16 = vld [vmem:[%s1] sm:$0xff]
    %v17 = vld [vmem:[%s1 + $0x8] sm:$0xff]
    %v18 = vld [vmem:[%s1 + $0x10] sm:$0xff]
    %v19 = vld [vmem:[%s1 + $0x18] sm:$0xff]
    %v20 = vld [vmem:[%s2] sm:$0x1]
    %v22 = vperm.slane %v20, 0
    %vm24 = vcmask 261120
    %v26 = vsel %vm24, %v15, 0
    %28 = vmatpush.msra.mxu0 0.0
    %29 = vmatpush.msra.mxu0 0.0
    %30 = vmatpush.msra.mxu0 0.0
    %31 = vmatpush.msra.mxu0 0.0
    %32 = vmatpush.msra.mxu0 0.0
    %33 = vmatpush.msra.mxu0 0.0
    %34 = vmatpush.msra.mxu0 0.0
    %35 = vmatpush.msra.mxu0 0.0
    %36 = vmatpush.msra.mxu0 0.0
    %37 = vmatpush.msra.mxu0 0.0
    %38 = vmatpush.msra.mxu0 0.0
    %39 = vmatpush.msra.mxu0 0.0
    %40 = vmatpush.msra.mxu0 %v19
    %41 = vmatpush.msra.mxu0 %v18
    %42 = vmatpush.msra.mxu0 %v17
    %43 = vmatpush.msra.mxu0 %v16
    %44 = vmatmul.f32.gmra.mxu0 %v26
    %v45 = vpop.f32.mrf.mxu0
    %v46 = vadd.f32 %v22, %v45
    %47 = vdwg.mxu0
    %vm48 = vcmask 9216
    %49 = vst.msk [vmem:[#allocation2] sm:$0x3] %vm48, %v46
    // Predicated region
    $region14: #{tpu_custom_call.1} parent=1 // pred_check
      _
    $region15: #{tpu_custom_call.1} parent=1 // pred_check_branch
      %51 = sbr.rel (0) target = $region17
    $region16: #{tpu_custom_call.1} parent=1 // pred_region
      %53 = vsyncadd [#allocation3], 0
      %s55 = sshll.u32 [#allocation2], 4
      %s56 = int_to_ptr.vmem [resolvable:$true] %s55
      %s57 = sshll.u32 %s3, 4
      %s58 = int_to_ptr.hbm [resolvable:$true] %s57
      %60 = dma.vmem_to_hbm [thread:$0]  %s56, 32, %s58, [#allocation3]
    $region17: #{tpu_custom_call.1} parent=1 // pred_fallthru
      _
    // Predicated region
    $region18: #{tpu_custom_call.1} parent=1 // pred_check
      _
    $region19: #{tpu_custom_call.1} parent=1 // pred_check_branch
      %62 = sbr.rel (0) target = $region21
    $region20: #{tpu_custom_call.1} parent=1 // pred_region
      %64 = dma.done [#allocation3], 32
    $region21: #{tpu_custom_call.1} parent=1 // pred_fallthru
      _
    %65 = vsyncpa [#allocation3], 1

// kernel: tpu_custom_call.1
$region0: #{tpu_custom_call.1}
  #allocation0 [shape = 'u32[]', space=smem, size = 0x4, offset = 0x4, fixed_abs, tag = 'smem constant byte address 0x4 - core index']
  #allocation1 [shape = 'u32[72,128]{1,0:T(1,128)}', space=vmem, size = 0x9000, scoped, tag = 'internal scratch']
  %s0 = inlined_call_operand.vmem [shape: f32[2,32], index: 0, kind: input, shape index: {}]
  %s1 = inlined_call_operand.vmem [shape: f32[32,2], index: 1, kind: input, shape index: {}]
  %s2 = inlined_call_operand.vmem [shape: f32[1,2], index: 2, kind: input, shape index: {}]
  %s3 = inlined_call_operand.hbm [shape: f32[2,2], index: 3, kind: output, shape index: {}]
  %s4 = sld [smem:[#allocation0]]
  $region22: #{tpu_custom_call.1} parent=0
    _
  %s6 = ssub.s32 1, %s4
  %s7 = scalar_select 0, %s6, %s4
  $region1: #{tpu_custom_call.1} parent=0
    #allocation2 [shape = 'u8[1024]{0}', space=vmem, size = 0x400, scoped, tag = 'output window, operand 0, single buffered']
    #allocation3 [shape = 's32[1]{0}', space=sflag, size = 0x4, scoped, tag = 'scoped memory for tpu_custom_call.1']
    %8 = vsyncpa [#allocation3], 0
    // Predicated region
    $region2: #{tpu_custom_call.1} parent=1 // pred_check
      _
    $region3: #{tpu_custom_call.1} parent=1 // pred_check_branch
      %10 = sbr.rel (0) target = $region5
    $region4: #{tpu_custom_call.1} parent=1 // pred_region
      _
    $region5: #{tpu_custom_call.1} parent=1 // pred_fallthru
      _
    // Predicated region
    $region6: #{tpu_custom_call.1} parent=1 // pred_check
      _
    $region7: #{tpu_custom_call.1} parent=1 // pred_check_branch
      %12 = sbr.rel (0) target = $region9
    $region8: #{tpu_custom_call.1} parent=1 // pred_region
      _
    $region9: #{tpu_custom_call.1} parent=1 // pred_fallthru
      _
    // Predicated region
    $region10: #{tpu_custom_call.1} parent=1 // pred_check
      _
    $region11: #{tpu_custom_call.1} parent=1 // pred_check_branch
      %14 = sbr.rel (0) target = $region13
    $region12: #{tpu_custom_call.1} parent=1 // pred_region
      _
    $region13: #{tpu_custom_call.1} parent=1 // pred_fallthru
      _
    %v15 = vld [vmem:[%s0] sm:$0x3]
    %v16 = vld [vmem:[%s1] sm:$0xff]
    %v17 = vld [vmem:[%s1 + $0x8] sm:$0xff]
    %v18 = vld [vmem:[%s1 + $0x10] sm:$0xff]
    %v19 = vld [vmem:[%s1 + $0x18] sm:$0xff]
    %v20 = vld [vmem:[%s2] sm:$0x1]
    %v22 = vperm.slane %v20, 0
    %vm24 = vcmask 261120
    %v26 = vsel %vm24, %v15, 0
    %28 = vmatpush.msra.mxu0 0.0
    %29 = vmatpush.msra.mxu0 0.0
    %30 = vmatpush.msra.mxu0 0.0
    %31 = vmatpush.msra.mxu0 0.0
    %32 = vmatpush.msra.mxu0 0.0
    %33 = vmatpush.msra.mxu0 0.0
    %34 = vmatpush.msra.mxu0 0.0
    %35 = vmatpush.msra.mxu0 0.0
    %36 = vmatpush.msra.mxu0 0.0
    %37 = vmatpush.msra.mxu0 0.0
    %38 = vmatpush.msra.mxu0 0.0
    %39 = vmatpush.msra.mxu0 0.0
    %40 = vmatpush.msra.mxu0 %v19
    %41 = vmatpush.msra.mxu0 %v18
    %42 = vmatpush.msra.mxu0 %v17
    %43 = vmatpush.msra.mxu0 %v16
    %44 = vmatmul.f32.gmra.mxu0 %v26
    %v45 = vpop.f32.mrf.mxu0
    %v46 = vadd.f32 %v22, %v45
    %47 = vdwg.mxu0
    %vm48 = vcmask 9216
    %49 = vst.msk [vmem:[#allocation2] sm:$0x3] %vm48, %v46
    // Predicated region
    $region14: #{tpu_custom_call.1} parent=1 // pred_check
      _
    $region15: #{tpu_custom_call.1} parent=1 // pred_check_branch
      %51 = sbr.rel (0) target = $region17
    $region16: #{tpu_custom_call.1} parent=1 // pred_region
      %53 = vsyncadd [#allocation3], 0
      %s55 = sshll.u32 [#allocation2], 4
      %s56 = int_to_ptr.vmem [resolvable:$true] %s55
      %s57 = sshll.u32 %s3, 4
      %s58 = int_to_ptr.hbm [resolvable:$true] %s57
      %60 = dma.vmem_to_hbm [thread:$0]  %s56, 32, %s58, [#allocation3]
    $region17: #{tpu_custom_call.1} parent=1 // pred_fallthru
      _
    // Predicated region
    $region18: #{tpu_custom_call.1} parent=1 // pred_check
      _
    $region19: #{tpu_custom_call.1} parent=1 // pred_check_branch
      %62 = sbr.rel (0) target = $region21
    $region20: #{tpu_custom_call.1} parent=1 // pred_region
      %64 = dma.done [#allocation3], 32
    $region21: #{tpu_custom_call.1} parent=1 // pred_fallthru
      _
    %65 = vsyncpa [#allocation3], 1

</llo_original>
